<compile_context>
chip_gen: v7x
topology: tpu7x:2x2x1
jax: 0.10.0
libtpu: 0.0.40
codegen_flags: <defaults>
</compile_context>

<pallas_src>
import numpy as np
import jax
import jax.numpy as jnp
from jax.experimental import pallas as pl
from jax.experimental.pallas import tpu as pltpu


_LANE = 128
_SUBLANE = 8
_NEG_INF = -1e30
_BLOCK_VMEM_BUDGET = 24 * 1024 * 1024   # per-block working-set target
_VMEM_LIMIT_BYTES = 48 * 1024 * 1024    # safe on v5e/v6e (128 MiB) and v7x (64 MiB)


def _round_up(x, m):
    return (x + m - 1) // m * m


# ----------------------------------------------------------------------------
# Kernel
# ----------------------------------------------------------------------------
def _make_kernel(block_B, L, K_max, D, Cp, OutPad, C):
    def kernel(x_ref, w_ref, b_ref, mask_ref, wfc_ref, bfc_ref, out_ref):
        # x_ref   : (block_B, L+K_max-1, D)  zero-padded embedding block (compute dtype)
        # w_ref   : (K_max, D, Cp)           fused per-tap conv weights (compute dtype)
        # b_ref   : (1, Cp)                  fused conv bias (f32)
        # mask_ref: (L, Cp)                  additive time-validity mask (0 / -1e30, f32)
        # wfc_ref : (1, Cp) if C == 1 else (Cp, OutPad)  (f32)
        # bfc_ref : (1, OutPad)              (f32)
        # out_ref : (block_B, OutPad)        lane-dense output block (f32)
        x = x_ref[...]
        # In-kernel im2col: K_max shifted matmuls accumulated in f32 (no slab).
        acc = jnp.zeros((block_B * L, Cp), jnp.float32)
        for k in range(K_max):                               # static unroll, K_max small
            xk = x[:, k:k + L, :].reshape(block_B * L, D)
            acc = acc + jnp.dot(xk, w_ref[k],
                                preferred_element_type=jnp.float32)   # MXU
        s = acc.reshape(block_B, L, Cp) + mask_ref[...][None, :, :]
        pooled = jnp.max(s, axis=1)                          # (bB, Cp)  max over time (XLU)
        feat = jnp.maximum(pooled + b_ref[...], 0.0)         # bias + ReLU (VPU)
        # TODO(synk): dropout treated as identity (eval semantics); training-mode
        # dropout would use pltpu.prng_seed / pltpu.prng_random_bits here.
        if C == 1:
            # C = 1: VPU multiply + lane reduction; bias replicated across OutPad
            # lanes so the broadcast-add yields a lane-dense (bB, OutPad) store.
            logit = jnp.sum(feat * wfc_ref[...], axis=-1, keepdims=True) + bfc_ref[...]
        else:
            logit = jnp.dot(feat, wfc_ref[...],
                            preferred_element_type=jnp.float32) + bfc_ref[...]
        out_ref[...] = jax.nn.sigmoid(logit).astype(out_ref.dtype)

    return kernel


def _pick_block_b(B, per_elem_bytes, fixed_bytes):
    """Largest multiple-of-8 batch block whose working set fits the VMEM budget,
    capped so the batch grid always has at least 2 iterations."""
    avail = _BLOCK_VMEM_BUDGET - fixed_bytes
    bb = max(_SUBLANE, (avail // max(per_elem_bytes, 1)) // _SUBLANE * _SUBLANE)
    bb = min(bb, max(_SUBLANE, _round_up(pl.cdiv(B, 2), _SUBLANE)))
    return bb


# ----------------------------------------------------------------------------
# Wrapper
# ----------------------------------------------------------------------------
def cnn_discriminator_forward(emb, conv_ws, conv_bs, wfc, bfc, Ks,
                              compute_dtype=jnp.bfloat16):
    """emb: (B, L, D) f32; conv_ws[i]: (Ks[i], D, Co); conv_bs[i]: (1, Co);
    wfc: (len(Ks)*Co, C); bfc: (1, C).  Returns (B, C) probabilities."""
    B, L, D = emb.shape
    Ks = tuple(int(k) for k in Ks)
    K_max = max(Ks)
    assert L >= K_max, f"sequence length {L} must be >= max filter size {K_max}"
    nK = len(Ks)
    Co = conv_ws[0].shape[-1]
    C = wfc.shape[-1]
    nKCo = nK * Co
    Cp = _round_up(nKCo, _LANE)          # lane-padded fused conv channels
    OutPad = _round_up(C, _LANE)         # lane-dense output width
    L_pad = L + K_max - 1
    itemsize = jnp.dtype(compute_dtype).itemsize

    # ---- generation-aware block sizing (counts the f32 intermediates) --------
    per_elem = (2 * L_pad * D * itemsize         # input block, double-buffered
                + 2 * L * Cp * 4                 # f32 conv accumulator + masked copy
                + 2 * OutPad * 4)                # output block, double-buffered
    wfc_elems = Cp if C == 1 else Cp * OutPad
    fixed = (2 * K_max * D * Cp * itemsize       # fused conv weight
             + 2 * (Cp + L * Cp + wfc_elems + OutPad) * 4)
    block_B = _pick_block_b(B, per_elem, fixed)
    num_blocks = max(2, pl.cdiv(B, block_B))     # >= 2 steps (v7x megacore / pipeline)
    B_pad = num_blocks * block_B

    # ---- wrapper-side layout plumbing only (emb is read exactly once) --------
    emb_p = jnp.zeros((B_pad, L_pad, D), compute_dtype)
    emb_p = emb_p.at[:B, :L, :].set(emb.astype(compute_dtype))

    w_fused = jnp.zeros((K_max, D, Cp), jnp.float32)
    b_fused = jnp.zeros((1, Cp), jnp.float32)
    mask_np = np.zeros((L, Cp), np.float32)      # padded channels stay 0 (harmless)
    for i, (K, w, b) in enumerate(zip(Ks, conv_ws, conv_bs)):
        w_fused = w_fused.at[:K, :, i * Co:(i + 1) * Co].set(w.astype(jnp.float32))
        b_fused = b_fused.at[:, i * Co:(i + 1) * Co].set(
            b.reshape(1, Co).astype(jnp.float32))
        mask_np[L - K + 1:, i * Co:(i + 1) * Co] = _NEG_INF   # windows past seq end
    w_fused = w_fused.astype(compute_dtype)
    mask = jnp.asarray(mask_np)

    if C == 1:
        wfc_arg = jnp.zeros((1, Cp), jnp.float32).at[:, :nKCo].set(
            wfc.reshape(1, nKCo).astype(jnp.float32))
        bfc_arg = jnp.broadcast_to(bfc.reshape(1, 1).astype(jnp.float32), (1, OutPad))
    else:
        wfc_arg = jnp.zeros((Cp, OutPad), jnp.float32).at[:nKCo, :C].set(
            wfc.astype(jnp.float32))
        bfc_arg = jnp.zeros((1, OutPad), jnp.float32).at[:, :C].set(
            bfc.reshape(1, C).astype(jnp.float32))

    kernel = _make_kernel(block_B, L, K_max, D, Cp, OutPad, C)

    flops = 2 * B_pad * L * K_max * D * Cp + 2 * B_pad * Cp * OutPad
    bytes_accessed = (emb_p.size * itemsize + w_fused.size * itemsize
                      + (b_fused.size + mask.size + wfc_arg.size + bfc_arg.size) * 4
                      + B_pad * OutPad * 4)

    out = pl.pallas_call(
        kernel,
        out_shape=jax.ShapeDtypeStruct((B_pad, OutPad), jnp.float32),
        grid_spec=pltpu.PrefetchScalarGridSpec(
            num_scalar_prefetch=0,
            grid=(num_blocks,),
            in_specs=[
                pl.BlockSpec((block_B, L_pad, D), lambda i: (i, 0, 0)),   # emb block
                pl.BlockSpec((K_max, D, Cp), lambda i: (0, 0, 0)),        # fused conv W
                pl.BlockSpec((1, Cp), lambda i: (0, 0)),                  # fused bias
                pl.BlockSpec((L, Cp), lambda i: (0, 0)),                  # time mask
                pl.BlockSpec(wfc_arg.shape, lambda i: (0, 0)),            # fc weight
                pl.BlockSpec((1, OutPad), lambda i: (0, 0)),              # fc bias
            ],
            out_specs=pl.BlockSpec((block_B, OutPad), lambda i: (i, 0)),
        ),
        compiler_params=pltpu.CompilerParams(
            dimension_semantics=("parallel",),
            vmem_limit_bytes=_VMEM_LIMIT_BYTES),
        cost_estimate=pl.CostEstimate(
            flops=int(flops),
            transcendentals=int(B_pad * OutPad),
            bytes_accessed=int(bytes_accessed)),
    )(emb_p, w_fused, b_fused, mask, wfc_arg, bfc_arg)

    return out[:B, :C]


# ----------------------------------------------------------------------------
# Pure-JAX reference (mirrors the PyTorch module in eval mode)
# ----------------------------------------------------------------------------
def reference_forward(emb, conv_ws, conv_bs, wfc, bfc, Ks):
    feats = []
    for K, w, b in zip(Ks, conv_ws, conv_bs):
        L = emb.shape[1]
        Lout = L - K + 1
        out = jnp.zeros((emb.shape[0], Lout, w.shape[-1]), jnp.float32)
        for k in range(K):
            out = out + jnp.einsum('bld,dc->blc', emb[:, k:k + Lout, :], w[k])
        out = jax.nn.relu(out + b[0][None, None, :])
        feats.append(jnp.max(out, axis=1))
    feat = jnp.concatenate(feats, axis=1)
    return jax.nn.sigmoid(feat @ wfc + bfc)


# ----------------------------------------------------------------------------
# Demo / correctness check
# ----------------------------------------------------------------------------
if __name__ == "__main__":
    B, L = 2, 8                 # batch, sequence length
    V, D = 20, 32               # vocab size, embed dim
    Ks = (2, 3, 4)              # filter sizes
    Co = 16                     # num filters
    padding_idx = 0
    nKCo = len(Ks) * Co

    key = jax.random.PRNGKey(0)
    k_emb, k_x, k_fc, k_fc3, *k_convs = jax.random.split(key, 4 + 2 * len(Ks))

    embed_table = 0.1 * jax.random.normal(k_emb, (V, D), jnp.float32)
    embed_table = embed_table.at[padding_idx].set(0.0)        # padding_idx row = 0

    conv_ws, conv_bs = [], []
    for K, kk in zip(Ks, k_convs[:len(Ks)]):
        conv_ws.append(jax.random.normal(kk, (K, D, Co), jnp.float32)
                       / jnp.sqrt(float(K * D)))
    for K, kk in zip(Ks, k_convs[len(Ks):]):
        conv_bs.append(0.01 * jax.random.normal(kk, (1, Co), jnp.float32))

    # Token ids + embedding lookup (plain-JAX gather glue).
    x = jax.random.randint(k_x, (B, L), 0, V)
    emb = embed_table[x]                                      # (B, L, D)

    # ---- num_classes = 2 -> C = 1 (binary head; VPU lane-reduce path) --------
    wfc = jax.random.normal(k_fc, (nKCo, 1), jnp.float32) / jnp.sqrt(float(nKCo))
    bfc = jnp.zeros((1, 1), jnp.float32)
    ref = reference_forward(emb, conv_ws, conv_bs, wfc, bfc, Ks)

    prob_f32 = cnn_discriminator_forward(emb, conv_ws, conv_bs, wfc, bfc, Ks,
                                         compute_dtype=jnp.float32)
    prob_f32 = jax.block_until_ready(prob_f32)
    assert prob_f32.shape == (B, 1), (prob_f32.shape, (B, 1))
    assert jnp.allclose(prob_f32, ref, atol=1e-5, rtol=1e-5), (prob_f32, ref)

    prob_bf16 = cnn_discriminator_forward(emb, conv_ws, conv_bs, wfc, bfc, Ks)
    prob_bf16 = jax.block_until_ready(prob_bf16)              # default bf16 MXU inputs
    assert jnp.allclose(prob_bf16, ref, atol=5e-2), (prob_bf16, ref)

    # ---- num_classes = 3 -> C = 3 (multi-class head; padded MXU fc path) -----
    wfc3 = jax.random.normal(k_fc3, (nKCo, 3), jnp.float32) / jnp.sqrt(float(nKCo))
    bfc3 = jnp.zeros((1, 3), jnp.float32)
    ref3 = reference_forward(emb, conv_ws, conv_bs, wfc3, bfc3, Ks)
    prob3 = cnn_discriminator_forward(emb, conv_ws, conv_bs, wfc3, bfc3, Ks,
                                      compute_dtype=jnp.float32)
    prob3 = jax.block_until_ready(prob3)
    assert prob3.shape == (B, 3), (prob3.shape, (B, 3))
    assert jnp.allclose(prob3, ref3, atol=1e-5, rtol=1e-5), (prob3, ref3)

    print("KERNEL_OK")
</pallas_src>

<mosaic_0001>
module attributes {stable_mosaic.version = 11 : i64} {
  func.func @kernel(%arg0: i32, %arg1: memref<8x11x32xf32, #tpu.memory_space<vmem>>, %arg2: memref<4x32x128xf32, #tpu.memory_space<vmem>>, %arg3: memref<1x128xf32, #tpu.memory_space<vmem>>, %arg4: memref<8x128xf32, #tpu.memory_space<vmem>>, %arg5: memref<1x128xf32, #tpu.memory_space<vmem>>, %arg6: memref<1x128xf32, #tpu.memory_space<vmem>>, %arg7: memref<8x128xf32, #tpu.memory_space<vmem>>) attributes {dimension_semantics = [#tpu.dimension_semantics<parallel>], iteration_bounds = array<i64: 2>, scalar_prefetch = 0 : i64, scratch_operands = 0 : i64, tpu.core_type = #tpu.core_type<tc>, window_params = [{transform_indices = @transform_0, window_bounds = array<i64: 8, 11, 32>}, {pipeline_mode = #tpu.pipeline_mode<synchronous>, transform_indices = @transform_1, window_bounds = array<i64: 4, 32, 128>}, {pipeline_mode = #tpu.pipeline_mode<synchronous>, transform_indices = @transform_2, window_bounds = array<i64: 1, 128>}, {pipeline_mode = #tpu.pipeline_mode<synchronous>, transform_indices = @transform_3, window_bounds = array<i64: 8, 128>}, {pipeline_mode = #tpu.pipeline_mode<synchronous>, transform_indices = @transform_4, window_bounds = array<i64: 1, 128>}, {pipeline_mode = #tpu.pipeline_mode<synchronous>, transform_indices = @transform_5, window_bounds = array<i64: 1, 128>}, {transform_indices = @transform_6, window_bounds = array<i64: 8, 128>}]} {
    %c0 = arith.constant 0 : index
    %c0_0 = arith.constant 0 : index
    %c0_1 = arith.constant 0 : index
    %0 = vector.load %arg1[%c0, %c0_0, %c0_1] : memref<8x11x32xf32, #tpu.memory_space<vmem>>, vector<8x11x32xf32>
    %cst = arith.constant 0.000000e+00 : f32
    %1 = vector.broadcast %cst : f32 to vector<64x128xf32>
    %2 = vector.extract_strided_slice %0 {offsets = [0, 0, 0], sizes = [8, 8, 32], strides = [1, 1, 1]} : vector<8x11x32xf32> to vector<8x8x32xf32>
    %3 = vector.shape_cast %2 : vector<8x8x32xf32> to vector<64x32xf32>
    %c0_2 = arith.constant 0 : index
    %c0_3 = arith.constant 0 : index
    %c0_4 = arith.constant 0 : index
    %4 = vector.load %arg2[%c0_2, %c0_3, %c0_4] : memref<4x32x128xf32, #tpu.memory_space<vmem>>, vector<1x32x128xf32>
    %5 = vector.shape_cast %4 : vector<1x32x128xf32> to vector<32x128xf32>
    %cst_5 = arith.constant dense<0.000000e+00> : vector<64x128xf32>
    %6 = tpu.matmul %3, %5, %cst_5 {dimension_numbers = #tpu.dot_dimension_numbers<[1], [0], [0], [1], [0, 0, 1, 1], [], []>} : vector<64x32xf32>, vector<32x128xf32>, vector<64x128xf32> -> vector<64x128xf32>
    %7 = arith.addf %1, %6 : vector<64x128xf32>
    %8 = vector.extract_strided_slice %0 {offsets = [0, 1, 0], sizes = [8, 8, 32], strides = [1, 1, 1]} : vector<8x11x32xf32> to vector<8x8x32xf32>
    %9 = vector.shape_cast %8 : vector<8x8x32xf32> to vector<64x32xf32>
    %c1 = arith.constant 1 : index
    %c0_6 = arith.constant 0 : index
    %c0_7 = arith.constant 0 : index
    %10 = vector.load %arg2[%c1, %c0_6, %c0_7] : memref<4x32x128xf32, #tpu.memory_space<vmem>>, vector<1x32x128xf32>
    %11 = vector.shape_cast %10 : vector<1x32x128xf32> to vector<32x128xf32>
    %cst_8 = arith.constant dense<0.000000e+00> : vector<64x128xf32>
    %12 = tpu.matmul %9, %11, %cst_8 {dimension_numbers = #tpu.dot_dimension_numbers<[1], [0], [0], [1], [0, 0, 1, 1], [], []>} : vector<64x32xf32>, vector<32x128xf32>, vector<64x128xf32> -> vector<64x128xf32>
    %13 = arith.addf %7, %12 : vector<64x128xf32>
    %14 = vector.extract_strided_slice %0 {offsets = [0, 2, 0], sizes = [8, 8, 32], strides = [1, 1, 1]} : vector<8x11x32xf32> to vector<8x8x32xf32>
    %15 = vector.shape_cast %14 : vector<8x8x32xf32> to vector<64x32xf32>
    %c2 = arith.constant 2 : index
    %c0_9 = arith.constant 0 : index
    %c0_10 = arith.constant 0 : index
    %16 = vector.load %arg2[%c2, %c0_9, %c0_10] : memref<4x32x128xf32, #tpu.memory_space<vmem>>, vector<1x32x128xf32>
    %17 = vector.shape_cast %16 : vector<1x32x128xf32> to vector<32x128xf32>
    %cst_11 = arith.constant dense<0.000000e+00> : vector<64x128xf32>
    %18 = tpu.matmul %15, %17, %cst_11 {dimension_numbers = #tpu.dot_dimension_numbers<[1], [0], [0], [1], [0, 0, 1, 1], [], []>} : vector<64x32xf32>, vector<32x128xf32>, vector<64x128xf32> -> vector<64x128xf32>
    %19 = arith.addf %13, %18 : vector<64x128xf32>
    %20 = vector.extract_strided_slice %0 {offsets = [0, 3, 0], sizes = [8, 8, 32], strides = [1, 1, 1]} : vector<8x11x32xf32> to vector<8x8x32xf32>
    %21 = vector.shape_cast %20 : vector<8x8x32xf32> to vector<64x32xf32>
    %c3 = arith.constant 3 : index
    %c0_12 = arith.constant 0 : index
    %c0_13 = arith.constant 0 : index
    %22 = vector.load %arg2[%c3, %c0_12, %c0_13] : memref<4x32x128xf32, #tpu.memory_space<vmem>>, vector<1x32x128xf32>
    %23 = vector.shape_cast %22 : vector<1x32x128xf32> to vector<32x128xf32>
    %cst_14 = arith.constant dense<0.000000e+00> : vector<64x128xf32>
    %24 = tpu.matmul %21, %23, %cst_14 {dimension_numbers = #tpu.dot_dimension_numbers<[1], [0], [0], [1], [0, 0, 1, 1], [], []>} : vector<64x32xf32>, vector<32x128xf32>, vector<64x128xf32> -> vector<64x128xf32>
    %25 = arith.addf %19, %24 : vector<64x128xf32>
    %26 = vector.shape_cast %25 : vector<64x128xf32> to vector<8x8x128xf32>
    %c0_15 = arith.constant 0 : index
    %c0_16 = arith.constant 0 : index
    %27 = vector.load %arg4[%c0_15, %c0_16] : memref<8x128xf32, #tpu.memory_space<vmem>>, vector<8x128xf32>
    %28 = vector.shape_cast %27 : vector<8x128xf32> to vector<1x8x128xf32>
    %29 = vector.broadcast %28 : vector<1x8x128xf32> to vector<8x8x128xf32>
    %30 = arith.addf %26, %29 : vector<8x8x128xf32>
    %cst_17 = arith.constant dense<0xFF800000> : vector<8x128xf32>
    %31 = vector.multi_reduction <maximumf>, %30, %cst_17 [1] : vector<8x8x128xf32> to vector<8x128xf32>
    %c0_18 = arith.constant 0 : index
    %c0_19 = arith.constant 0 : index
    %32 = vector.load %arg3[%c0_18, %c0_19] : memref<1x128xf32, #tpu.memory_space<vmem>>, vector<1x128xf32>
    %33 = vector.broadcast %32 : vector<1x128xf32> to vector<8x128xf32>
    %34 = arith.addf %31, %33 : vector<8x128xf32>
    %cst_20 = arith.constant 0.000000e+00 : f32
    %35 = vector.broadcast %cst_20 : f32 to vector<8x128xf32>
    %36 = arith.maximumf %34, %35 : vector<8x128xf32>
    %c0_21 = arith.constant 0 : index
    %c0_22 = arith.constant 0 : index
    %37 = vector.load %arg5[%c0_21, %c0_22] : memref<1x128xf32, #tpu.memory_space<vmem>>, vector<1x128xf32>
    %38 = vector.broadcast %37 : vector<1x128xf32> to vector<8x128xf32>
    %39 = arith.mulf %36, %38 : vector<8x128xf32>
    %cst_23 = arith.constant dense<0.000000e+00> : vector<8xf32>
    %40 = vector.multi_reduction <add>, %39, %cst_23 [1] : vector<8x128xf32> to vector<8xf32>
    %41 = vector.shape_cast %40 : vector<8xf32> to vector<8x1xf32>
    %c0_24 = arith.constant 0 : index
    %c0_25 = arith.constant 0 : index
    %42 = vector.load %arg6[%c0_24, %c0_25] : memref<1x128xf32, #tpu.memory_space<vmem>>, vector<1x128xf32>
    %43 = vector.broadcast %41 : vector<8x1xf32> to vector<8x128xf32>
    %44 = vector.broadcast %42 : vector<1x128xf32> to vector<8x128xf32>
    %45 = arith.addf %43, %44 : vector<8x128xf32>
    %46 = arith.negf %45 : vector<8x128xf32>
    %47 = math.exp %46 : vector<8x128xf32>
    %cst_26 = arith.constant 1.000000e+00 : f32
    %48 = vector.broadcast %cst_26 : f32 to vector<8x128xf32>
    %49 = arith.addf %48, %47 : vector<8x128xf32>
    %50 = arith.divf %48, %49 : vector<8x128xf32>
    %c0_27 = arith.constant 0 : index
    %c0_28 = arith.constant 0 : index
    %51 = vector.load %arg7[%c0_27, %c0_28] : memref<8x128xf32, #tpu.memory_space<vmem>>, vector<8x128xf32>
    tpu.vector_store %arg7[%c0_27, %c0_28], %50 {strides = array<i32>} : memref<8x128xf32, #tpu.memory_space<vmem>>, vector<8x128xf32>,
    return
  }
  func.func @transform_0(%arg0: i32) -> (i32, i32, i32) {
    %c0_i32 = arith.constant 0 : i32
    %c0_i32_0 = arith.constant 0 : i32
    %c0_i32_1 = arith.constant 0 : i32
    return %arg0, %c0_i32, %c0_i32_0 : i32, i32, i32
  }
  func.func @transform_1(%arg0: i32) -> (i32, i32, i32) {
    %c0_i32 = arith.constant 0 : i32
    %c0_i32_0 = arith.constant 0 : i32
    %c0_i32_1 = arith.constant 0 : i32
    %c0_i32_2 = arith.constant 0 : i32
    return %c0_i32, %c0_i32_0, %c0_i32_1 : i32, i32, i32
  }
  func.func @transform_2(%arg0: i32) -> (i32, i32) {
    %c0_i32 = arith.constant 0 : i32
    %c0_i32_0 = arith.constant 0 : i32
    %c0_i32_1 = arith.constant 0 : i32
    return %c0_i32, %c0_i32_0 : i32, i32
  }
  func.func @transform_3(%arg0: i32) -> (i32, i32) {
    %c0_i32 = arith.constant 0 : i32
    %c0_i32_0 = arith.constant 0 : i32
    %c0_i32_1 = arith.constant 0 : i32
    return %c0_i32, %c0_i32_0 : i32, i32
  }
  func.func @transform_4(%arg0: i32) -> (i32, i32) {
    %c0_i32 = arith.constant 0 : i32
    %c0_i32_0 = arith.constant 0 : i32
    %c0_i32_1 = arith.constant 0 : i32
    return %c0_i32, %c0_i32_0 : i32, i32
  }
  func.func @transform_5(%arg0: i32) -> (i32, i32) {
    %c0_i32 = arith.constant 0 : i32
    %c0_i32_0 = arith.constant 0 : i32
    %c0_i32_1 = arith.constant 0 : i32
    return %c0_i32, %c0_i32_0 : i32, i32
  }
  func.func @transform_6(%arg0: i32) -> (i32, i32) {
    %c0_i32 = arith.constant 0 : i32
    %c0_i32_0 = arith.constant 0 : i32
    return %arg0, %c0_i32 : i32, i32
  }
}

</mosaic_0001>

<llo_original>
// kernel: tpu_custom_call.1
$region0: #{tpu_custom_call.1}
  #allocation0 [shape = 'u32[]', space=smem, size = 0x4, offset = 0x4, fixed_abs, tag = 'smem constant byte address 0x4 - core index']
  #allocation1 [shape = 'u32[144,128]{1,0:T(1,128)}', space=vmem, size = 0x12000, scoped, tag = 'internal scratch']
  %s0 = inlined_call_operand.vmem [shape: f32[16,11,32], index: 0, kind: input, shape index: {}]
  %s1 = inlined_call_operand.vmem [shape: f32[4,32,128], index: 1, kind: input, shape index: {}]
  %s2 = inlined_call_operand.vmem [shape: f32[1,128], index: 2, kind: input, shape index: {}]
  %s3 = inlined_call_operand.vmem [shape: f32[8,128], index: 3, kind: input, shape index: {}]
  %s4 = inlined_call_operand.vmem [shape: f32[1,128], index: 4, kind: input, shape index: {}]
  %s5 = inlined_call_operand.vmem [shape: f32[1,128], index: 5, kind: input, shape index: {}]
  %s6 = inlined_call_operand.hbm [shape: f32[16,128], index: 6, kind: output, shape index: {}]
  %s7 = sld [smem:[#allocation0]]
  $region57: #{tpu_custom_call.1} parent=0
    _
  %s9 = ssub.s32 1, %s7
  %s10 = scalar_select 0, %s9, %s7
  $region1: #{tpu_custom_call.1} parent=0
    #allocation2 [shape = 'u8[8192]{0}', space=vmem, size = 0x2000, scoped, tag = 'output window, operand 0']
    #allocation3 [shape = 's32[2]{0}', space=sflag, size = 0x8, scoped, tag = 'scoped memory for tpu_custom_call.1']
    %11 = vsyncpa [#allocation3], 0
    %s12 = scalar_lea.sflag [#allocation3], 1
    %13 = vsyncpa %s12, 0
    loop: start=0, step=1, limit=4
    $region2: #{tpu_custom_call.1} parent=1 // loop_pre_header
      _
    $region3: #{tpu_custom_call.1} parent=1 // loop_header
      %s15 = sphi 0, %s19
      %p16 = scmp.ge.s32.totalorder %s15, 4
      %s25 = sphi 0, %s27
      %s28 = sphi 0, %s25
      %s29 = sphi 0, %s28
      %s45 = sphi 0, %s29
      %s49 = sphi 0, %s49
      %s51 = sphi 0, %s49
      %s52 = sphi 0, %s51
      %s66 = sphi 0, %s52
      %s70 = sphi 0, %s70
      %s72 = sphi 0, %s70
      %s73 = sphi 0, %s72
      %s87 = sphi 0, %s73
      %s91 = sphi 0, %s91
      %s93 = sphi 0, %s91
      %s94 = sphi 0, %s93
      %s108 = sphi 0, %s94
      %s112 = sphi 0, %s112
      %s114 = sphi 0, %s112
      %s115 = sphi 0, %s114
      %s129 = sphi 0, %s115
      %s133 = sphi 0, %s133
      %s135 = sphi 0, %s133
      %s136 = sphi 0, %s135
      %s150 = sphi 0, %s136
      %s156 = sphi 0, %s158
      %s159 = sphi 0, %s156
      %s160 = sphi 0, %s159
      %s176 = sphi 0, %s160
    $region4: #{tpu_custom_call.1} parent=1 // loop_header_branch
      %18 = sbr.rel (%p16) target = $region8
    $region5: #{tpu_custom_call.1} parent=1 // loop_body
      %s20 = ssub.s32 %s15, 1
      %s21 = ssub.s32 %s15, 2
      %s22 = sadd.s32 %s15, 1
      %s23 = ssub.s32 %s15, %s22
      %p24 = scmp.eq.s32.totalorder %s23, 0
      %s26 = sadd.s32 %s25, 1
      %s27 = scalar_select %p24, %s25, %s26
      %p30 = pneg %p24
      %p31 = scmp.eq.s32.totalorder %s15, 1
      %p32 = por %p30, %p31
      %p33 = scmp.ne.s32.totalorder %s25, %s28
      %p34 = scmp.eq.s32.totalorder %s15, 0
      %p35 = por %p33, %p34
      %p36 = scmp.ne.s32.totalorder %s25, %s28
      %p37 = scmp.eq.s32.totalorder %s20, 1
      %p38 = por %p36, %p37
      %p39 = scmp.ne.s32.totalorder %s28, %s29
      %p40 = scmp.eq.s32.totalorder %s20, 0
      %p41 = por %p39, %p40
      %p42 = scmp.ne.s32.totalorder %s28, %s29
      %p43 = scmp.eq.s32.totalorder %s21, 1
      %p44 = por %p42, %p43
      %p46 = scmp.ne.s32.totalorder %s29, %s45
      %p47 = scmp.eq.s32.totalorder %s21, 0
      %p48 = por %p46, %p47
      %s50 = sadd.s32 %s49, 1
      %p53 = scmp.eq.s32.totalorder %s15, 1
      %p54 = scmp.ne.s32.totalorder %s49, %s51
      %p55 = scmp.eq.s32.totalorder %s15, 0
      %p56 = por %p54, %p55
      %p57 = scmp.ne.s32.totalorder %s49, %s51
      %p58 = scmp.eq.s32.totalorder %s20, 1
      %p59 = por %p57, %p58
      %p60 = scmp.ne.s32.totalorder %s51, %s52
      %p61 = scmp.eq.s32.totalorder %s20, 0
      %p62 = por %p60, %p61
      %p63 = scmp.ne.s32.totalorder %s51, %s52
      %p64 = scmp.eq.s32.totalorder %s21, 1
      %p65 = por %p63, %p64
      %p67 = scmp.ne.s32.totalorder %s52, %s66
      %p68 = scmp.eq.s32.totalorder %s21, 0
      %p69 = por %p67, %p68
      %s71 = sadd.s32 %s70, 1
      %p74 = scmp.eq.s32.totalorder %s15, 1
      %p75 = scmp.ne.s32.totalorder %s70, %s72
      %p76 = scmp.eq.s32.totalorder %s15, 0
      %p77 = por %p75, %p76
      %p78 = scmp.ne.s32.totalorder %s70, %s72
      %p79 = scmp.eq.s32.totalorder %s20, 1
      %p80 = por %p78, %p79
      %p81 = scmp.ne.s32.totalorder %s72, %s73
      %p82 = scmp.eq.s32.totalorder %s20, 0
      %p83 = por %p81, %p82
      %p84 = scmp.ne.s32.totalorder %s72, %s73
      %p85 = scmp.eq.s32.totalorder %s21, 1
      %p86 = por %p84, %p85
      %p88 = scmp.ne.s32.totalorder %s73, %s87
      %p89 = scmp.eq.s32.totalorder %s21, 0
      %p90 = por %p88, %p89
      %s92 = sadd.s32 %s91, 1
      %p95 = scmp.eq.s32.totalorder %s15, 1
      %p96 = scmp.ne.s32.totalorder %s91, %s93
      %p97 = scmp.eq.s32.totalorder %s15, 0
      %p98 = por %p96, %p97
      %p99 = scmp.ne.s32.totalorder %s91, %s93
      %p100 = scmp.eq.s32.totalorder %s20, 1
      %p101 = por %p99, %p100
      %p102 = scmp.ne.s32.totalorder %s93, %s94
      %p103 = scmp.eq.s32.totalorder %s20, 0
      %p104 = por %p102, %p103
      %p105 = scmp.ne.s32.totalorder %s93, %s94
      %p106 = scmp.eq.s32.totalorder %s21, 1
      %p107 = por %p105, %p106
      %p109 = scmp.ne.s32.totalorder %s94, %s108
      %p110 = scmp.eq.s32.totalorder %s21, 0
      %p111 = por %p109, %p110
      %s113 = sadd.s32 %s112, 1
      %p116 = scmp.eq.s32.totalorder %s15, 1
      %p117 = scmp.ne.s32.totalorder %s112, %s114
      %p118 = scmp.eq.s32.totalorder %s15, 0
      %p119 = por %p117, %p118
      %p120 = scmp.ne.s32.totalorder %s112, %s114
      %p121 = scmp.eq.s32.totalorder %s20, 1
      %p122 = por %p120, %p121
      %p123 = scmp.ne.s32.totalorder %s114, %s115
      %p124 = scmp.eq.s32.totalorder %s20, 0
      %p125 = por %p123, %p124
      %p126 = scmp.ne.s32.totalorder %s114, %s115
      %p127 = scmp.eq.s32.totalorder %s21, 1
      %p128 = por %p126, %p127
      %p130 = scmp.ne.s32.totalorder %s115, %s129
      %p131 = scmp.eq.s32.totalorder %s21, 0
      %p132 = por %p130, %p131
      %s134 = sadd.s32 %s133, 1
      %p137 = scmp.eq.s32.totalorder %s15, 1
      %p138 = scmp.ne.s32.totalorder %s133, %s135
      %p139 = scmp.eq.s32.totalorder %s15, 0
      %p140 = por %p138, %p139
      %p141 = scmp.ne.s32.totalorder %s133, %s135
      %p142 = scmp.eq.s32.totalorder %s20, 1
      %p143 = por %p141, %p142
      %p144 = scmp.ne.s32.totalorder %s135, %s136
      %p145 = scmp.eq.s32.totalorder %s20, 0
      %p146 = por %p144, %p145
      %p147 = scmp.ne.s32.totalorder %s135, %s136
      %p148 = scmp.eq.s32.totalorder %s21, 1
      %p149 = por %p147, %p148
      %p151 = scmp.ne.s32.totalorder %s136, %s150
      %p152 = scmp.eq.s32.totalorder %s21, 0
      %p153 = por %p151, %p152
      %s154 = ssub.s32 %s15, %s22
      %p155 = scmp.eq.s32.totalorder %s154, 0
      %s157 = sadd.s32 %s156, 1
      %s158 = scalar_select %p155, %s156, %s157
      %p161 = pneg %p155
      %p162 = scmp.eq.s32.totalorder %s15, 1
      %p163 = por %p161, %p162
      %p164 = scmp.ne.s32.totalorder %s156, %s159
      %p165 = scmp.eq.s32.totalorder %s15, 0
      %p166 = por %p164, %p165
      %p167 = scmp.ne.s32.totalorder %s156, %s159
      %p168 = scmp.eq.s32.totalorder %s20, 1
      %p169 = por %p167, %p168
      %p170 = scmp.ne.s32.totalorder %s159, %s160
      %p171 = scmp.eq.s32.totalorder %s20, 0
      %p172 = por %p170, %p171
      %p173 = scmp.ne.s32.totalorder %s159, %s160
      %p174 = scmp.eq.s32.totalorder %s21, 1
      %p175 = por %p173, %p174
      %p177 = scmp.ne.s32.totalorder %s160, %s176
      %p178 = scmp.eq.s32.totalorder %s21, 0
      %p179 = por %p177, %p178
      %p180 = scmp.le.s32.totalorder 1, %s15
      %p181 = scmp.lt.s32.totalorder %s15, 3
      %p182 = pnand %p180, %p181
      %p183 = pneg %p182
      // Predicated region
      $region9: #{tpu_custom_call.1} parent=5 // pred_check
        _
      $region10: #{tpu_custom_call.1} parent=5 // pred_check_branch
        %185 = sbr.rel (%p182) target = $region12
      $region11: #{tpu_custom_call.1} parent=5 // pred_region
        %s186 = ssub.s32 %s15, 1
        // Predicated region
        $region13: #{tpu_custom_call.1} parent=11 // pred_check
          %p187 = pneg %p62
        $region14: #{tpu_custom_call.1} parent=11 // pred_check_branch
          %189 = sbr.rel (%p187) target = $region16
        $region15: #{tpu_custom_call.1} parent=11 // pred_region
          _
        $region16: #{tpu_custom_call.1} parent=11 // pred_fallthru
          _
        // Predicated region
        $region17: #{tpu_custom_call.1} parent=11 // pred_check
          %p190 = pneg %p83
        $region18: #{tpu_custom_call.1} parent=11 // pred_check_branch
          %192 = sbr.rel (%p190) target = $region20
        $region19: #{tpu_custom_call.1} parent=11 // pred_region
          _
        $region20: #{tpu_custom_call.1} parent=11 // pred_fallthru
          _
        // Predicated region
        $region21: #{tpu_custom_call.1} parent=11 // pred_check
          %p193 = pneg %p104
        $region22: #{tpu_custom_call.1} parent=11 // pred_check_branch
          %195 = sbr.rel (%p193) target = $region24
        $region23: #{tpu_custom_call.1} parent=11 // pred_region
          _
        $region24: #{tpu_custom_call.1} parent=11 // pred_fallthru
          _
        // Predicated region
        $region25: #{tpu_custom_call.1} parent=11 // pred_check
          %p196 = pneg %p125
        $region26: #{tpu_custom_call.1} parent=11 // pred_check_branch
          %198 = sbr.rel (%p196) target = $region28
        $region27: #{tpu_custom_call.1} parent=11 // pred_region
          _
        $region28: #{tpu_custom_call.1} parent=11 // pred_fallthru
          _
        // Predicated region
        $region29: #{tpu_custom_call.1} parent=11 // pred_check
          %p199 = pneg %p146
        $region30: #{tpu_custom_call.1} parent=11 // pred_check_branch
          %201 = sbr.rel (%p199) target = $region32
        $region31: #{tpu_custom_call.1} parent=11 // pred_region
          _
        $region32: #{tpu_custom_call.1} parent=11 // pred_fallthru
          _
      $region12: #{tpu_custom_call.1} parent=5 // pred_fallthru
        _
      %p202 = scmp.lt.s32.totalorder %s15, 2
      // Predicated region
      $region33: #{tpu_custom_call.1} parent=5 // pred_check
        %p203 = pneg %p202
      $region34: #{tpu_custom_call.1} parent=5 // pred_check_branch
        %205 = sbr.rel (%p203) target = $region36
      $region35: #{tpu_custom_call.1} parent=5 // pred_region
        // Predicated region
        $region37: #{tpu_custom_call.1} parent=35 // pred_check
          %p206 = pneg %p35
        $region38: #{tpu_custom_call.1} parent=35 // pred_check_branch
          %208 = sbr.rel (%p206) target = $region40
        $region39: #{tpu_custom_call.1} parent=35 // pred_region
          %s209 = smul.u32 8, %s15
          %p210 = scmp.lt.s32.totalorder %s209, 15
          %s211 = scalar_select %p210, %s209, 15
          %s212 = smul.addr %s211, 2
          %s213 = smul.addr %s212, 8
          %s214 = scalar_lea.vmem %s0, %s213
          %s215 = smul.u32 8, %s15
        $region40: #{tpu_custom_call.1} parent=35 // pred_fallthru
          _
      $region36: #{tpu_custom_call.1} parent=5 // pred_fallthru
        _
      %p216 = scmp.le.s32.totalorder 1, %s15
      %p217 = scmp.lt.s32.totalorder %s15, 3
      %p218 = pnand %p216, %p217
      %p219 = pneg %p218
      // Predicated region
      $region41: #{tpu_custom_call.1} parent=5 // pred_check
        _
      $region42: #{tpu_custom_call.1} parent=5 // pred_check_branch
        %221 = sbr.rel (%p218) target = $region44
      $region43: #{tpu_custom_call.1} parent=5 // pred_region
        %s222 = ssub.s32 %s15, 1
        %s223 = smul.u32 8, %s20
        %p224 = scmp.lt.s32.totalorder %s223, 15
        %s225 = scalar_select %p224, %s223, 15
        %s226 = smul.addr %s225, 2
        %s227 = smul.addr %s226, 8
        %s228 = scalar_lea.vmem %s0, %s227
        %p229 = pneg %p41
        %p230 = pneg %p38
        %p231 = pneg %p62
        %p232 = pneg %p59
        %p233 = pneg %p83
        %p234 = pneg %p80
        %p235 = pneg %p104
        %p236 = pneg %p101
        %p237 = pneg %p125
        %p238 = pneg %p122
        %p239 = pneg %p146
        %p240 = pneg %p143
        %p241 = pneg %p172
        %p242 = pneg %p169
        %s243 = sand.u32 %s159, 1
        %s244 = scalar_lea.sflag [#allocation3], %s243
        %s245 = sand.u32 %s159, 1
        %s246 = smul.addr %s245, 8
        %s247 = scalar_lea.vmem [#allocation2], %s246
        %s248 = smul.u32 8, %s20
        %p249 = scmp.lt.s32.totalorder %s248, 15
        %s250 = scalar_select %p249, %s248, 15
        %s251 = smul.addr %s250, 2
        %s252 = smul.addr %s251, 8
        %s253 = scalar_lea.vmem %s0, %s252
        %s254 = smul.u32 8, %s20
        %v255 = vld [vmem:[%s253] sm:$0xff]
        %v256 = vld [vmem:[%s253 + $0x8] sm:$0x7]
        %v257 = vld [vmem:[%s253 + $0x10] sm:$0xff]
        %v258 = vld [vmem:[%s253 + $0x18] sm:$0x7]
        %v259 = vld [vmem:[%s253 + $0x20] sm:$0xff]
        %v260 = vld [vmem:[%s253 + $0x28] sm:$0x7]
        %v261 = vld [vmem:[%s253 + $0x30] sm:$0xff]
        %v262 = vld [vmem:[%s253 + $0x38] sm:$0x7]
        %v263 = vld [vmem:[%s253 + $0x40] sm:$0xff]
        %v264 = vld [vmem:[%s253 + $0x48] sm:$0x7]
        %v265 = vld [vmem:[%s253 + $0x50] sm:$0xff]
        %v266 = vld [vmem:[%s253 + $0x58] sm:$0x7]
        %v267 = vld [vmem:[%s253 + $0x60] sm:$0xff]
        %v268 = vld [vmem:[%s253 + $0x68] sm:$0x7]
        %v269 = vld [vmem:[%s253 + $0x70] sm:$0xff]
        %v270 = vld [vmem:[%s253 + $0x78] sm:$0x7]
        %v271 = vld [vmem:[%s1] sm:$0xff]
        %v272 = vld [vmem:[%s1 + $0x8] sm:$0xff]
        %v273 = vld [vmem:[%s1 + $0x10] sm:$0xff]
        %v274 = vld [vmem:[%s1 + $0x18] sm:$0xff]
        %vm291 = vcmask 1046528
        %v292 = vrot.slane %v255, 1
        %v293 = vrot.slane %v256, 1
        %v294 = vsel %vm291, %v292, %v293
        %v295 = vrot.slane %v257, 1
        %v296 = vrot.slane %v258, 1
        %v297 = vsel %vm291, %v295, %v296
        %v298 = vrot.slane %v259, 1
        %v299 = vrot.slane %v260, 1
        %v300 = vsel %vm291, %v298, %v299
        %v301 = vrot.slane %v261, 1
        %v302 = vrot.slane %v262, 1
        %v303 = vsel %vm291, %v301, %v302
        %v304 = vrot.slane %v263, 1
        %v305 = vrot.slane %v264, 1
        %v306 = vsel %vm291, %v304, %v305
        %v307 = vrot.slane %v265, 1
        %v308 = vrot.slane %v266, 1
        %v309 = vsel %vm291, %v307, %v308
        %v310 = vrot.slane %v267, 1
        %v311 = vrot.slane %v268, 1
        %v312 = vsel %vm291, %v310, %v311
        %v313 = vrot.slane %v269, 1
        %v314 = vrot.slane %v270, 1
        %v315 = vsel %vm291, %v313, %v314
        %s316 = scalar_lea.vmem %s1, 32
        %v317 = vld [vmem:[%s316] sm:$0xff]
        %v318 = vld [vmem:[%s316 + $0x8] sm:$0xff]
        %v319 = vld [vmem:[%s316 + $0x10] sm:$0xff]
        %v320 = vld [vmem:[%s316 + $0x18] sm:$0xff]
        %vm321 = vcmask 261120
        %v322 = vsel %vm321, %v294, 0
        %v324 = vsel %vm321, %v297, 0
        %v326 = vsel %vm321, %v300, 0
        %v328 = vsel %vm321, %v303, 0
        %v330 = vsel %vm321, %v306, 0
        %v332 = vsel %vm321, %v309, 0
        %v334 = vsel %vm321, %v312, 0
        %v336 = vsel %vm321, %v315, 0
        %338 = vmatprep.subr.mxu0 0.0
        %339 = vmatpush1.msra.mxu0 %v317
        %340 = vmatprep.subr.mxu0 0.0
        %341 = vmatpush1.msra.mxu0 %v318
        %342 = vmatprep.subr.mxu0 0.0
        %343 = vmatpush1.msra.mxu0 %v319
        %344 = vmatprep.subr.mxu0 0.0
        %345 = vmatpush1.msra.mxu0 %v320
        %346 = vmatprep.subr.mxu0 0.0
        %347 = vmatpush1.msra.mxu0 0.0
        %348 = vmatprep.subr.mxu0 0.0
        %349 = vmatpush1.msra.mxu0 0.0
        %350 = vmatprep.subr.mxu0 0.0
        %351 = vmatpush1.msra.mxu0 0.0
        %352 = vmatprep.subr.mxu0 0.0
        %353 = vmatpush1.msra.mxu0 0.0
        %354 = vmatprep.subr.mxu0 0.0
        %355 = vmatpush1.msra.mxu0 0.0
        %356 = vmatprep.subr.mxu0 0.0
        %357 = vmatpush1.msra.mxu0 0.0
        %358 = vmatprep.subr.mxu0 0.0
        %359 = vmatpush1.msra.mxu0 0.0
        %360 = vmatprep.subr.mxu0 0.0
        %361 = vmatpush1.msra.mxu0 0.0
        %362 = vmatprep.subr.mxu0 0.0
        %363 = vmatpush1.msra.mxu0 0.0
        %364 = vmatprep.subr.mxu0 0.0
        %365 = vmatpush1.msra.mxu0 0.0
        %366 = vmatprep.subr.mxu0 0.0
        %367 = vmatpush1.msra.mxu0 0.0
        %368 = vmatprep.subr.mxu0 0.0
        %369 = vmatpush1.msra.mxu0 0.0
        %370 = vmatprep.subr.mxu0 0.0
        %371 = vmatpush1.msra.mxu0 0.0
        %372 = vmatprep.subr.mxu0 0.0
        %373 = vmatpush1.msra.mxu0 0.0
        %374 = vmatprep.subr.mxu0 0.0
        %375 = vmatpush1.msra.mxu0 0.0
        %376 = vmatprep.subr.mxu0 0.0
        %377 = vmatpush1.msra.mxu0 0.0
        %378 = vmatprep.subr.mxu0 0.0
        %379 = vmatpush1.msra.mxu0 0.0
        %380 = vmatprep.subr.mxu0 0.0
        %381 = vmatpush1.msra.mxu0 0.0
        %382 = vmatprep.subr.mxu0 0.0
        %383 = vmatpush1.msra.mxu0 0.0
        %384 = vmatprep.subr.mxu0 0.0
        %385 = vmatpush1.msra.mxu0 0.0
        %386 = vmatprep.subr.mxu0 0.0
        %387 = vmatpush1.msra.mxu0 0.0
        %388 = vmatprep.subr.mxu0 0.0
        %389 = vmatpush1.msra.mxu0 0.0
        %390 = vmatprep.subr.mxu0 0.0
        %391 = vmatpush1.msra.mxu0 0.0
        %392 = vmatprep.subr.mxu0 0.0
        %393 = vmatpush1.msra.mxu0 0.0
        %394 = vmatprep.subr.mxu0 0.0
        %395 = vmatpush1.msra.mxu0 0.0
        %396 = vmatprep.subr.mxu0 0.0
        %397 = vmatpush1.msra.mxu0 0.0
        %398 = vmatprep.subr.mxu0 0.0
        %399 = vmatpush1.msra.mxu0 0.0
        %400 = vmatprep.subr.mxu0 0.0
        %401 = vmatpush1.msra.mxu0 0.0
        %402 = vmatprep.mubr.f32.mxu0 0.0
        %403 = vmatmul.mubr.f32.gmra.mrb[0].mxu0 %v322
        %v404 = vpop.f32.mrb[0].mxu0
        %v405 = vadd.f32 0.0, %v404
        %v406 = vpop.f32.mrb[0].mxu0
        %407 = vmatprep.mubr.f32.mxu0 0.0
        %408 = vmatmul.mubr.f32.gmra.mrb[0].mxu0 %v324
        %v409 = vpop.f32.mrb[0].mxu0
        %v410 = vadd.f32 0.0, %v409
        %v411 = vpop.f32.mrb[0].mxu0
        %412 = vmatprep.mubr.f32.mxu0 0.0
        %413 = vmatmul.mubr.f32.gmra.mrb[0].mxu0 %v326
        %v414 = vpop.f32.mrb[0].mxu0
        %v415 = vadd.f32 0.0, %v414
        %v416 = vpop.f32.mrb[0].mxu0
        %417 = vmatprep.mubr.f32.mxu0 0.0
        %418 = vmatmul.mubr.f32.gmra.mrb[0].mxu0 %v328
        %v419 = vpop.f32.mrb[0].mxu0
        %v420 = vadd.f32 0.0, %v419
        %v421 = vpop.f32.mrb[0].mxu0
        %422 = vmatprep.mubr.f32.mxu0 0.0
        %423 = vmatmul.mubr.f32.gmra.mrb[0].mxu0 %v330
        %v424 = vpop.f32.mrb[0].mxu0
        %v425 = vadd.f32 0.0, %v424
        %v426 = vpop.f32.mrb[0].mxu0
        %427 = vmatprep.mubr.f32.mxu0 0.0
        %428 = vmatmul.mubr.f32.gmra.mrb[0].mxu0 %v332
        %v429 = vpop.f32.mrb[0].mxu0
        %v430 = vadd.f32 0.0, %v429
        %v431 = vpop.f32.mrb[0].mxu0
        %432 = vmatprep.mubr.f32.mxu0 0.0
        %433 = vmatmul.mubr.f32.gmra.mrb[0].mxu0 %v334
        %v434 = vpop.f32.mrb[0].mxu0
        %v435 = vadd.f32 0.0, %v434
        %v436 = vpop.f32.mrb[0].mxu0
        %437 = vmatprep.mubr.f32.mxu0 0.0
        %438 = vmatmul.mubr.f32.gmra.mrb[0].mxu0 %v336
        %v439 = vpop.f32.mrb[0].mxu0
        %v440 = vadd.f32 0.0, %v439
        %v441 = vpop.f32.mrb[0].mxu0
        %442 = vdwg.mxu0
        %v443 = vsel %vm321, %v255, 0
        %v445 = vsel %vm321, %v257, 0
        %v447 = vsel %vm321, %v259, 0
        %v449 = vsel %vm321, %v261, 0
        %v451 = vsel %vm321, %v263, 0
        %v453 = vsel %vm321, %v265, 0
        %v455 = vsel %vm321, %v267, 0
        %v457 = vsel %vm321, %v269, 0
        %459 = vmatprep.subr.mxu0 0.0
        %460 = vmatpush1.msra.mxu0 %v271
        %461 = vmatprep.subr.mxu0 0.0
        %462 = vmatpush1.msra.mxu0 %v272
        %463 = vmatprep.subr.mxu0 0.0
        %464 = vmatpush1.msra.mxu0 %v273
        %465 = vmatprep.subr.mxu0 0.0
        %466 = vmatpush1.msra.mxu0 %v274
        %467 = vmatprep.subr.mxu0 0.0
        %468 = vmatpush1.msra.mxu0 0.0
        %469 = vmatprep.subr.mxu0 0.0
        %470 = vmatpush1.msra.mxu0 0.0
        %471 = vmatprep.subr.mxu0 0.0
        %472 = vmatpush1.msra.mxu0 0.0
        %473 = vmatprep.subr.mxu0 0.0
        %474 = vmatpush1.msra.mxu0 0.0
        %475 = vmatprep.subr.mxu0 0.0
        %476 = vmatpush1.msra.mxu0 0.0
        %477 = vmatprep.subr.mxu0 0.0
        %478 = vmatpush1.msra.mxu0 0.0
        %479 = vmatprep.subr.mxu0 0.0
        %480 = vmatpush1.msra.mxu0 0.0
        %481 = vmatprep.subr.mxu0 0.0
        %482 = vmatpush1.msra.mxu0 0.0
        %483 = vmatprep.subr.mxu0 0.0
        %484 = vmatpush1.msra.mxu0 0.0
        %485 = vmatprep.subr.mxu0 0.0
        %486 = vmatpush1.msra.mxu0 0.0
        %487 = vmatprep.subr.mxu0 0.0
        %488 = vmatpush1.msra.mxu0 0.0
        %489 = vmatprep.subr.mxu0 0.0
        %490 = vmatpush1.msra.mxu0 0.0
        %491 = vmatprep.subr.mxu0 0.0
        %492 = vmatpush1.msra.mxu0 0.0
        %493 = vmatprep.subr.mxu0 0.0
        %494 = vmatpush1.msra.mxu0 0.0
        %495 = vmatprep.subr.mxu0 0.0
        %496 = vmatpush1.msra.mxu0 0.0
        %497 = vmatprep.subr.mxu0 0.0
        %498 = vmatpush1.msra.mxu0 0.0
        %499 = vmatprep.subr.mxu0 0.0
        %500 = vmatpush1.msra.mxu0 0.0
        %501 = vmatprep.subr.mxu0 0.0
        %502 = vmatpush1.msra.mxu0 0.0
        %503 = vmatprep.subr.mxu0 0.0
        %504 = vmatpush1.msra.mxu0 0.0
        %505 = vmatprep.subr.mxu0 0.0
        %506 = vmatpush1.msra.mxu0 0.0
        %507 = vmatprep.subr.mxu0 0.0
        %508 = vmatpush1.msra.mxu0 0.0
        %509 = vmatprep.subr.mxu0 0.0
        %510 = vmatpush1.msra.mxu0 0.0
        %511 = vmatprep.subr.mxu0 0.0
        %512 = vmatpush1.msra.mxu0 0.0
        %513 = vmatprep.subr.mxu0 0.0
        %514 = vmatpush1.msra.mxu0 0.0
        %515 = vmatprep.subr.mxu0 0.0
        %516 = vmatpush1.msra.mxu0 0.0
        %517 = vmatprep.subr.mxu0 0.0
        %518 = vmatpush1.msra.mxu0 0.0
        %519 = vmatprep.subr.mxu0 0.0
        %520 = vmatpush1.msra.mxu0 0.0
        %521 = vmatprep.subr.mxu0 0.0
        %522 = vmatpush1.msra.mxu0 0.0
        %523 = vmatprep.mubr.f32.mxu0 0.0
        %524 = vmatmul.mubr.f32.gmra.mrb[0].mxu0 %v443
        %v525 = vpop.f32.mrb[0].mxu0
        %v526 = vadd.f32 %v405, %v525
        %v527 = vpop.f32.mrb[0].mxu0
        %528 = vmatprep.mubr.f32.mxu0 0.0
        %529 = vmatmul.mubr.f32.gmra.mrb[0].mxu0 %v445
        %v530 = vpop.f32.mrb[0].mxu0
        %v531 = vadd.f32 %v410, %v530
        %v532 = vpop.f32.mrb[0].mxu0
        %533 = vmatprep.mubr.f32.mxu0 0.0
        %534 = vmatmul.mubr.f32.gmra.mrb[0].mxu0 %v447
        %v535 = vpop.f32.mrb[0].mxu0
        %v536 = vadd.f32 %v415, %v535
        %v537 = vpop.f32.mrb[0].mxu0
        %538 = vmatprep.mubr.f32.mxu0 0.0
        %539 = vmatmul.mubr.f32.gmra.mrb[0].mxu0 %v449
        %v540 = vpop.f32.mrb[0].mxu0
        %v541 = vadd.f32 %v420, %v540
        %v542 = vpop.f32.mrb[0].mxu0
        %543 = vmatprep.mubr.f32.mxu0 0.0
        %544 = vmatmul.mubr.f32.gmra.mrb[0].mxu0 %v451
        %v545 = vpop.f32.mrb[0].mxu0
        %v546 = vadd.f32 %v425, %v545
        %v547 = vpop.f32.mrb[0].mxu0
        %548 = vmatprep.mubr.f32.mxu0 0.0
        %549 = vmatmul.mubr.f32.gmra.mrb[0].mxu0 %v453
        %v550 = vpop.f32.mrb[0].mxu0
        %v551 = vadd.f32 %v430, %v550
        %v552 = vpop.f32.mrb[0].mxu0
        %553 = vmatprep.mubr.f32.mxu0 0.0
        %554 = vmatmul.mubr.f32.gmra.mrb[0].mxu0 %v455
        %v555 = vpop.f32.mrb[0].mxu0
        %v556 = vadd.f32 %v435, %v555
        %v557 = vpop.f32.mrb[0].mxu0
        %558 = vmatprep.mubr.f32.mxu0 0.0
        %559 = vmatmul.mubr.f32.gmra.mrb[0].mxu0 %v457
        %v560 = vpop.f32.mrb[0].mxu0
        %v561 = vadd.f32 %v440, %v560
        %v562 = vpop.f32.mrb[0].mxu0
        %563 = vdwg.mxu0
        %vm564 = vcmask 1045504
        %v565 = vrot.slane %v255, 2
        %v566 = vrot.slane %v256, 2
        %v567 = vsel %vm564, %v565, %v566
        %v568 = vrot.slane %v257, 2
        %v569 = vrot.slane %v258, 2
        %v570 = vsel %vm564, %v568, %v569
        %v571 = vrot.slane %v259, 2
        %v572 = vrot.slane %v260, 2
        %v573 = vsel %vm564, %v571, %v572
        %v574 = vrot.slane %v261, 2
        %v575 = vrot.slane %v262, 2
        %v576 = vsel %vm564, %v574, %v575
        %v577 = vrot.slane %v263, 2
        %v578 = vrot.slane %v264, 2
        %v579 = vsel %vm564, %v577, %v578
        %v580 = vrot.slane %v265, 2
        %v581 = vrot.slane %v266, 2
        %v582 = vsel %vm564, %v580, %v581
        %v583 = vrot.slane %v267, 2
        %v584 = vrot.slane %v268, 2
        %v585 = vsel %vm564, %v583, %v584
        %v586 = vrot.slane %v269, 2
        %v587 = vrot.slane %v270, 2
        %v588 = vsel %vm564, %v586, %v587
        %s589 = scalar_lea.vmem %s1, 64
        %v590 = vld [vmem:[%s589] sm:$0xff]
        %v591 = vld [vmem:[%s589 + $0x8] sm:$0xff]
        %v592 = vld [vmem:[%s589 + $0x10] sm:$0xff]
        %v593 = vld [vmem:[%s589 + $0x18] sm:$0xff]
        %v594 = vsel %vm321, %v567, 0
        %v596 = vsel %vm321, %v570, 0
        %v598 = vsel %vm321, %v573, 0
        %v600 = vsel %vm321, %v576, 0
        %v602 = vsel %vm321, %v579, 0
        %v604 = vsel %vm321, %v582, 0
        %v606 = vsel %vm321, %v585, 0
        %v608 = vsel %vm321, %v588, 0
        %610 = vmatprep.subr.mxu0 0.0
        %611 = vmatpush1.msra.mxu0 %v590
        %612 = vmatprep.subr.mxu0 0.0
        %613 = vmatpush1.msra.mxu0 %v591
        %614 = vmatprep.subr.mxu0 0.0
        %615 = vmatpush1.msra.mxu0 %v592
        %616 = vmatprep.subr.mxu0 0.0
        %617 = vmatpush1.msra.mxu0 %v593
        %618 = vmatprep.subr.mxu0 0.0
        %619 = vmatpush1.msra.mxu0 0.0
        %620 = vmatprep.subr.mxu0 0.0
        %621 = vmatpush1.msra.mxu0 0.0
        %622 = vmatprep.subr.mxu0 0.0
        %623 = vmatpush1.msra.mxu0 0.0
        %624 = vmatprep.subr.mxu0 0.0
        %625 = vmatpush1.msra.mxu0 0.0
        %626 = vmatprep.subr.mxu0 0.0
        %627 = vmatpush1.msra.mxu0 0.0
        %628 = vmatprep.subr.mxu0 0.0
        %629 = vmatpush1.msra.mxu0 0.0
        %630 = vmatprep.subr.mxu0 0.0
        %631 = vmatpush1.msra.mxu0 0.0
        %632 = vmatprep.subr.mxu0 0.0
        %633 = vmatpush1.msra.mxu0 0.0
        %634 = vmatprep.subr.mxu0 0.0
        %635 = vmatpush1.msra.mxu0 0.0
        %636 = vmatprep.subr.mxu0 0.0
        %637 = vmatpush1.msra.mxu0 0.0
        %638 = vmatprep.subr.mxu0 0.0
        %639 = vmatpush1.msra.mxu0 0.0
        %640 = vmatprep.subr.mxu0 0.0
        %641 = vmatpush1.msra.mxu0 0.0
        %642 = vmatprep.subr.mxu0 0.0
        %643 = vmatpush1.msra.mxu0 0.0
        %644 = vmatprep.subr.mxu0 0.0
        %645 = vmatpush1.msra.mxu0 0.0
        %646 = vmatprep.subr.mxu0 0.0
        %647 = vmatpush1.msra.mxu0 0.0
        %648 = vmatprep.subr.mxu0 0.0
        %649 = vmatpush1.msra.mxu0 0.0
        %650 = vmatprep.subr.mxu0 0.0
        %651 = vmatpush1.msra.mxu0 0.0
        %652 = vmatprep.subr.mxu0 0.0
        %653 = vmatpush1.msra.mxu0 0.0
        %654 = vmatprep.subr.mxu0 0.0
        %655 = vmatpush1.msra.mxu0 0.0
        %656 = vmatprep.subr.mxu0 0.0
        %657 = vmatpush1.msra.mxu0 0.0
        %658 = vmatprep.subr.mxu0 0.0
        %659 = vmatpush1.msra.mxu0 0.0
        %660 = vmatprep.subr.mxu0 0.0
        %661 = vmatpush1.msra.mxu0 0.0
        %662 = vmatprep.subr.mxu0 0.0
        %663 = vmatpush1.msra.mxu0 0.0
        %664 = vmatprep.subr.mxu0 0.0
        %665 = vmatpush1.msra.mxu0 0.0
        %666 = vmatprep.subr.mxu0 0.0
        %667 = vmatpush1.msra.mxu0 0.0
        %668 = vmatprep.subr.mxu0 0.0
        %669 = vmatpush1.msra.mxu0 0.0
        %670 = vmatprep.subr.mxu0 0.0
        %671 = vmatpush1.msra.mxu0 0.0
        %672 = vmatprep.subr.mxu0 0.0
        %673 = vmatpush1.msra.mxu0 0.0
        %674 = vmatprep.mubr.f32.mxu0 0.0
        %675 = vmatmul.mubr.f32.gmra.mrb[0].mxu0 %v594
        %v676 = vpop.f32.mrb[0].mxu0
        %v677 = vadd.f32 0.0, %v676
        %v678 = vpop.f32.mrb[0].mxu0
        %679 = vmatprep.mubr.f32.mxu0 0.0
        %680 = vmatmul.mubr.f32.gmra.mrb[0].mxu0 %v596
        %v681 = vpop.f32.mrb[0].mxu0
        %v682 = vadd.f32 0.0, %v681
        %v683 = vpop.f32.mrb[0].mxu0
        %684 = vmatprep.mubr.f32.mxu0 0.0
        %685 = vmatmul.mubr.f32.gmra.mrb[0].mxu0 %v598
        %v686 = vpop.f32.mrb[0].mxu0
        %v687 = vadd.f32 0.0, %v686
        %v688 = vpop.f32.mrb[0].mxu0
        %689 = vmatprep.mubr.f32.mxu0 0.0
        %690 = vmatmul.mubr.f32.gmra.mrb[0].mxu0 %v600
        %v691 = vpop.f32.mrb[0].mxu0
        %v692 = vadd.f32 0.0, %v691
        %v693 = vpop.f32.mrb[0].mxu0
        %694 = vmatprep.mubr.f32.mxu0 0.0
        %695 = vmatmul.mubr.f32.gmra.mrb[0].mxu0 %v602
        %v696 = vpop.f32.mrb[0].mxu0
        %v697 = vadd.f32 0.0, %v696
        %v698 = vpop.f32.mrb[0].mxu0
        %699 = vmatprep.mubr.f32.mxu0 0.0
        %700 = vmatmul.mubr.f32.gmra.mrb[0].mxu0 %v604
        %v701 = vpop.f32.mrb[0].mxu0
        %v702 = vadd.f32 0.0, %v701
        %v703 = vpop.f32.mrb[0].mxu0
        %704 = vmatprep.mubr.f32.mxu0 0.0
        %705 = vmatmul.mubr.f32.gmra.mrb[0].mxu0 %v606
        %v706 = vpop.f32.mrb[0].mxu0
        %v707 = vadd.f32 0.0, %v706
        %v708 = vpop.f32.mrb[0].mxu0
        %709 = vmatprep.mubr.f32.mxu0 0.0
        %710 = vmatmul.mubr.f32.gmra.mrb[0].mxu0 %v608
        %v711 = vpop.f32.mrb[0].mxu0
        %v712 = vadd.f32 0.0, %v711
        %v713 = vpop.f32.mrb[0].mxu0
        %714 = vdwg.mxu0
        %v715 = vadd.f32 %v526, %v677
        %v716 = vadd.f32 %v531, %v682
        %v717 = vadd.f32 %v536, %v687
        %v718 = vadd.f32 %v541, %v692
        %v719 = vadd.f32 %v546, %v697
        %v720 = vadd.f32 %v551, %v702
        %v721 = vadd.f32 %v556, %v707
        %v722 = vadd.f32 %v561, %v712
        %vm723 = vcmask 1044480
        %v724 = vrot.slane %v255, 3
        %v725 = vrot.slane %v256, 3
        %v726 = vsel %vm723, %v724, %v725
        %v727 = vrot.slane %v257, 3
        %v728 = vrot.slane %v258, 3
        %v729 = vsel %vm723, %v727, %v728
        %v730 = vrot.slane %v259, 3
        %v731 = vrot.slane %v260, 3
        %v732 = vsel %vm723, %v730, %v731
        %v733 = vrot.slane %v261, 3
        %v734 = vrot.slane %v262, 3
        %v735 = vsel %vm723, %v733, %v734
        %v736 = vrot.slane %v263, 3
        %v737 = vrot.slane %v264, 3
        %v738 = vsel %vm723, %v736, %v737
        %v739 = vrot.slane %v265, 3
        %v740 = vrot.slane %v266, 3
        %v741 = vsel %vm723, %v739, %v740
        %v742 = vrot.slane %v267, 3
        %v743 = vrot.slane %v268, 3
        %v744 = vsel %vm723, %v742, %v743
        %v745 = vrot.slane %v269, 3
        %v746 = vrot.slane %v270, 3
        %v747 = vsel %vm723, %v745, %v746
        %s748 = scalar_lea.vmem %s1, 96
        %v749 = vld [vmem:[%s748] sm:$0xff]
        %v750 = vld [vmem:[%s748 + $0x8] sm:$0xff]
        %v751 = vld [vmem:[%s748 + $0x10] sm:$0xff]
        %v752 = vld [vmem:[%s748 + $0x18] sm:$0xff]
        %v753 = vsel %vm321, %v726, 0
        %v755 = vsel %vm321, %v729, 0
        %v757 = vsel %vm321, %v732, 0
        %v759 = vsel %vm321, %v735, 0
        %v761 = vsel %vm321, %v738, 0
        %v763 = vsel %vm321, %v741, 0
        %v765 = vsel %vm321, %v744, 0
        %v767 = vsel %vm321, %v747, 0
        %769 = vmatprep.subr.mxu0 0.0
        %770 = vmatpush1.msra.mxu0 %v749
        %771 = vmatprep.subr.mxu0 0.0
        %772 = vmatpush1.msra.mxu0 %v750
        %773 = vmatprep.subr.mxu0 0.0
        %774 = vmatpush1.msra.mxu0 %v751
        %775 = vmatprep.subr.mxu0 0.0
        %776 = vmatpush1.msra.mxu0 %v752
        %777 = vmatprep.subr.mxu0 0.0
        %778 = vmatpush1.msra.mxu0 0.0
        %779 = vmatprep.subr.mxu0 0.0
        %780 = vmatpush1.msra.mxu0 0.0
        %781 = vmatprep.subr.mxu0 0.0
        %782 = vmatpush1.msra.mxu0 0.0
        %783 = vmatprep.subr.mxu0 0.0
        %784 = vmatpush1.msra.mxu0 0.0
        %785 = vmatprep.subr.mxu0 0.0
        %786 = vmatpush1.msra.mxu0 0.0
        %787 = vmatprep.subr.mxu0 0.0
        %788 = vmatpush1.msra.mxu0 0.0
        %789 = vmatprep.subr.mxu0 0.0
        %790 = vmatpush1.msra.mxu0 0.0
        %791 = vmatprep.subr.mxu0 0.0
        %792 = vmatpush1.msra.mxu0 0.0
        %793 = vmatprep.subr.mxu0 0.0
        %794 = vmatpush1.msra.mxu0 0.0
        %795 = vmatprep.subr.mxu0 0.0
        %796 = vmatpush1.msra.mxu0 0.0
        %797 = vmatprep.subr.mxu0 0.0
        %798 = vmatpush1.msra.mxu0 0.0
        %799 = vmatprep.subr.mxu0 0.0
        %800 = vmatpush1.msra.mxu0 0.0
        %801 = vmatprep.subr.mxu0 0.0
        %802 = vmatpush1.msra.mxu0 0.0
        %803 = vmatprep.subr.mxu0 0.0
        %804 = vmatpush1.msra.mxu0 0.0
        %805 = vmatprep.subr.mxu0 0.0
        %806 = vmatpush1.msra.mxu0 0.0
        %807 = vmatprep.subr.mxu0 0.0
        %808 = vmatpush1.msra.mxu0 0.0
        %809 = vmatprep.subr.mxu0 0.0
        %810 = vmatpush1.msra.mxu0 0.0
        %811 = vmatprep.subr.mxu0 0.0
        %812 = vmatpush1.msra.mxu0 0.0
        %813 = vmatprep.subr.mxu0 0.0
        %814 = vmatpush1.msra.mxu0 0.0
        %815 = vmatprep.subr.mxu0 0.0
        %816 = vmatpush1.msra.mxu0 0.0
        %817 = vmatprep.subr.mxu0 0.0
        %818 = vmatpush1.msra.mxu0 0.0
        %819 = vmatprep.subr.mxu0 0.0
        %820 = vmatpush1.msra.mxu0 0.0
        %821 = vmatprep.subr.mxu0 0.0
        %822 = vmatpush1.msra.mxu0 0.0
        %823 = vmatprep.subr.mxu0 0.0
        %824 = vmatpush1.msra.mxu0 0.0
        %825 = vmatprep.subr.mxu0 0.0
        %826 = vmatpush1.msra.mxu0 0.0
        %827 = vmatprep.subr.mxu0 0.0
        %828 = vmatpush1.msra.mxu0 0.0
        %829 = vmatprep.subr.mxu0 0.0
        %830 = vmatpush1.msra.mxu0 0.0
        %831 = vmatprep.subr.mxu0 0.0
        %832 = vmatpush1.msra.mxu0 0.0
        %833 = vmatprep.mubr.f32.mxu0 0.0
        %834 = vmatmul.mubr.f32.gmra.mrb[0].mxu0 %v753
        %v835 = vpop.f32.mrb[0].mxu0
        %v836 = vadd.f32 0.0, %v835
        %v837 = vpop.f32.mrb[0].mxu0
        %838 = vmatprep.mubr.f32.mxu0 0.0
        %839 = vmatmul.mubr.f32.gmra.mrb[0].mxu0 %v755
        %v840 = vpop.f32.mrb[0].mxu0
        %v841 = vadd.f32 0.0, %v840
        %v842 = vpop.f32.mrb[0].mxu0
        %843 = vmatprep.mubr.f32.mxu0 0.0
        %844 = vmatmul.mubr.f32.gmra.mrb[0].mxu0 %v757
        %v845 = vpop.f32.mrb[0].mxu0
        %v846 = vadd.f32 0.0, %v845
        %v847 = vpop.f32.mrb[0].mxu0
        %848 = vmatprep.mubr.f32.mxu0 0.0
        %849 = vmatmul.mubr.f32.gmra.mrb[0].mxu0 %v759
        %v850 = vpop.f32.mrb[0].mxu0
        %v851 = vadd.f32 0.0, %v850
        %v852 = vpop.f32.mrb[0].mxu0
        %853 = vmatprep.mubr.f32.mxu0 0.0
        %854 = vmatmul.mubr.f32.gmra.mrb[0].mxu0 %v761
        %v855 = vpop.f32.mrb[0].mxu0
        %v856 = vadd.f32 0.0, %v855
        %v857 = vpop.f32.mrb[0].mxu0
        %858 = vmatprep.mubr.f32.mxu0 0.0
        %859 = vmatmul.mubr.f32.gmra.mrb[0].mxu0 %v763
        %v860 = vpop.f32.mrb[0].mxu0
        %v861 = vadd.f32 0.0, %v860
        %v862 = vpop.f32.mrb[0].mxu0
        %863 = vmatprep.mubr.f32.mxu0 0.0
        %864 = vmatmul.mubr.f32.gmra.mrb[0].mxu0 %v765
        %v865 = vpop.f32.mrb[0].mxu0
        %v866 = vadd.f32 0.0, %v865
        %v867 = vpop.f32.mrb[0].mxu0
        %868 = vmatprep.mubr.f32.mxu0 0.0
        %869 = vmatmul.mubr.f32.gmra.mrb[0].mxu0 %v767
        %v870 = vpop.f32.mrb[0].mxu0
        %v871 = vadd.f32 0.0, %v870
        %v872 = vpop.f32.mrb[0].mxu0
        %873 = vdwg.mxu0
        %v874 = vadd.f32 %v715, %v836
        %v875 = vadd.f32 %v716, %v841
        %v876 = vadd.f32 %v717, %v846
        %v877 = vadd.f32 %v718, %v851
        %v878 = vadd.f32 %v719, %v856
        %v879 = vadd.f32 %v720, %v861
        %v880 = vadd.f32 %v721, %v866
        %v881 = vadd.f32 %v722, %v871
        %v882 = vld [vmem:[%s3] sm:$0xff]
        %v883 = vadd.f32 %v874, %v882
        %v884 = vadd.f32 %v875, %v882
        %v885 = vadd.f32 %v876, %v882
        %v886 = vadd.f32 %v877, %v882
        %v887 = vadd.f32 %v878, %v882
        %v888 = vadd.f32 %v879, %v882
        %v889 = vadd.f32 %v880, %v882
        %v890 = vadd.f32 %v881, %v882
        %v891 = vrot.slane %v883, 4
        %v892 = vmax.f32 %v883, %v891
        %v893 = vrot.slane %v892, 2
        %v894 = vmax.f32 %v892, %v893
        %v895 = vrot.slane %v894, 1
        %v896 = vmax.f32 %v894, %v895
        %v897 = vrot.slane %v884, 4
        %v898 = vmax.f32 %v884, %v897
        %v899 = vrot.slane %v898, 2
        %v900 = vmax.f32 %v898, %v899
        %v901 = vrot.slane %v900, 1
        %v902 = vmax.f32 %v900, %v901
        %v903 = vrot.slane %v885, 4
        %v904 = vmax.f32 %v885, %v903
        %v905 = vrot.slane %v904, 2
        %v906 = vmax.f32 %v904, %v905
        %v907 = vrot.slane %v906, 1
        %v908 = vmax.f32 %v906, %v907
        %v909 = vrot.slane %v886, 4
        %v910 = vmax.f32 %v886, %v909
        %v911 = vrot.slane %v910, 2
        %v912 = vmax.f32 %v910, %v911
        %v913 = vrot.slane %v912, 1
        %v914 = vmax.f32 %v912, %v913
        %v915 = vrot.slane %v887, 4
        %v916 = vmax.f32 %v887, %v915
        %v917 = vrot.slane %v916, 2
        %v918 = vmax.f32 %v916, %v917
        %v919 = vrot.slane %v918, 1
        %v920 = vmax.f32 %v918, %v919
        %v921 = vrot.slane %v888, 4
        %v922 = vmax.f32 %v888, %v921
        %v923 = vrot.slane %v922, 2
        %v924 = vmax.f32 %v922, %v923
        %v925 = vrot.slane %v924, 1
        %v926 = vmax.f32 %v924, %v925
        %v927 = vrot.slane %v889, 4
        %v928 = vmax.f32 %v889, %v927
        %v929 = vrot.slane %v928, 2
        %v930 = vmax.f32 %v928, %v929
        %v931 = vrot.slane %v930, 1
        %v932 = vmax.f32 %v930, %v931
        %v933 = vrot.slane %v890, 4
        %v934 = vmax.f32 %v890, %v933
        %v935 = vrot.slane %v934, 2
        %v936 = vmax.f32 %v934, %v935
        %v937 = vrot.slane %v936, 1
        %v938 = vmax.f32 %v936, %v937
        %v939 = vld [vmem:[%s2] sm:$0x1]
        %v941 = vlaneseq
        %v942 = vshrl.u32 %v941, 7
        %v943 = vsub.s32 0, %v942
        %v944 = vrot.slane %v939, %v943
        %v946 = vadd.f32 %v896, %v944
        %v947 = vadd.f32 %v902, %v944
        %v948 = vadd.f32 %v908, %v944
        %v949 = vadd.f32 %v914, %v944
        %v950 = vadd.f32 %v920, %v944
        %v951 = vadd.f32 %v926, %v944
        %v952 = vadd.f32 %v932, %v944
        %v953 = vadd.f32 %v938, %v944
        %v954 = vmax.f32 %v946, 0.0
        %v955 = vmax.f32 %v947, 0.0
        %v956 = vmax.f32 %v948, 0.0
        %v957 = vmax.f32 %v949, 0.0
        %v958 = vmax.f32 %v950, 0.0
        %v959 = vmax.f32 %v951, 0.0
        %v960 = vmax.f32 %v952, 0.0
        %v961 = vmax.f32 %v953, 0.0
        %v962 = vld [vmem:[%s4] sm:$0x1]
        %v964 = vlaneseq
        %v965 = vshrl.u32 %v964, 7
        %v966 = vsub.s32 0, %v965
        %v967 = vrot.slane %v962, %v966
        %v969 = vmul.f32 %v954, %v967
        %v970 = vmul.f32 %v955, %v967
        %v971 = vmul.f32 %v956, %v967
        %v972 = vmul.f32 %v957, %v967
        %v973 = vmul.f32 %v958, %v967
        %v974 = vmul.f32 %v959, %v967
        %v975 = vmul.f32 %v960, %v967
        %v976 = vmul.f32 %v961, %v967
        %v985 = vrot.slane %v970, 7
        %vm986 = vcmask 1041409
        %v987 = vsel %vm986, %v985, %v969
        %v988 = vrot.slane %v971, 6
        %vm989 = vcmask 1042434
        %v990 = vsel %vm989, %v988, %v987
        %v991 = vrot.slane %v972, 5
        %vm992 = vcmask 1043459
        %v993 = vsel %vm992, %v991, %v990
        %v994 = vrot.slane %v973, 4
        %vm995 = vcmask 1044484
        %v996 = vsel %vm995, %v994, %v993
        %v997 = vrot.slane %v974, 3
        %vm998 = vcmask 1045509
        %v999 = vsel %vm998, %v997, %v996
        %v1000 = vrot.slane %v975, 2
        %vm1001 = vcmask 1046534
        %v1002 = vsel %vm1001, %v1000, %v999
        %v1003 = vrot.slane %v976, 1
        %vm1004 = vcmask 1047559
        %v1005 = vsel %vm1004, %v1003, %v1002
        %1007 = vadd.xlane.f32.xlu0 %v1005
        %v1008 = vpop.xlane.xlu0 %1007
        %v1009 = vld [vmem:[%s5] sm:$0x1]
        %v1011 = vlaneseq
        %v1012 = vshrl.u32 %v1011, 7
        %v1013 = vsub.s32 0, %v1012
        %v1014 = vrot.slane %v1009, %v1013
        %v1016 = vadd.f32 %v1008, %v1014
        %v1017 = vxor.u32 %v1016, 2147483648
        %v1018 = vmul.f32 %v1017, 1.442695
        %v1019 = vpow.pop %v1018
        %v1020 = vadd.f32 %v1019, 1.0
        %v1021 = vrcp.pop %v1020
        %v1022 = vmul.f32 1.0, %v1021
        %1023 = vst [vmem:[%s247] sm:$0xff] %v1022
        %s1024 = sand.u32 %s159, 1
        %s1025 = scalar_lea.sflag [#allocation3], %s1024
        %s1026 = sand.u32 %s159, 1
        %s1027 = smul.addr %s1026, 8
        %s1028 = scalar_lea.vmem [#allocation2], %s1027
        // Predicated region
        $region45: #{tpu_custom_call.1} parent=43 // pred_check
          %p1029 = pneg %p169
        $region46: #{tpu_custom_call.1} parent=43 // pred_check_branch
          %1031 = sbr.rel (%p1029) target = $region48
        $region47: #{tpu_custom_call.1} parent=43 // pred_region
          %s1033 = ssub.s32 128, 128
          %1034 = vsyncadd %s1025, %s1033
          %s1035 = smul.addr %s20, 128
          %s1036 = scalar_lea.hbm %s6, %s1035
          %s1038 = sshll.u32 %s1028, 4
          %s1039 = int_to_ptr.vmem [resolvable:$true] %s1038
          %1041 = dma.vmem_to_hbm [thread:$0]  %s1039, 128, %s1036, %s1025
        $region48: #{tpu_custom_call.1} parent=43 // pred_fallthru
          _
      $region44: #{tpu_custom_call.1} parent=5 // pred_fallthru
        _
      %p1042 = scmp.le.s32.totalorder 2, %s15
      // Predicated region
      $region49: #{tpu_custom_call.1} parent=5 // pred_check
        %p1043 = pneg %p1042
      $region50: #{tpu_custom_call.1} parent=5 // pred_check_branch
        %1045 = sbr.rel (%p1043) target = $region52
      $region51: #{tpu_custom_call.1} parent=5 // pred_region
        %s1046 = ssub.s32 %s15, 2
        // Predicated region
        $region53: #{tpu_custom_call.1} parent=51 // pred_check
          %p1047 = pneg %p175
        $region54: #{tpu_custom_call.1} parent=51 // pred_check_branch
          %1049 = sbr.rel (%p1047) target = $region56
        $region55: #{tpu_custom_call.1} parent=51 // pred_region
          %s1050 = sand.u32 %s160, 1
          %s1051 = scalar_lea.sflag [#allocation3], %s1050
          %s1052 = sand.u32 %s160, 1
          %s1053 = smul.addr %s1052, 8
          %s1054 = scalar_lea.vmem [#allocation2], %s1053
          %1055 = dma.done %s1051, 128
        $region56: #{tpu_custom_call.1} parent=51 // pred_fallthru
          _
      $region52: #{tpu_custom_call.1} parent=5 // pred_fallthru
        _
    $region6: #{tpu_custom_call.1} parent=1 // loop_footer
      %s19 = sadd.s32 1, %s15
    $region7: #{tpu_custom_call.1} parent=1 // loop_footer_branch
      %14 = sbr.rel target = $region3
    $region8: #{tpu_custom_call.1} parent=1 // loop_exit
      _
    %1056 = vsyncpa [#allocation3], 1
    %s1057 = scalar_lea.sflag [#allocation3], 1
    %1058 = vsyncpa %s1057, 1

</llo_original>
